<compile_context>
chip_gen: v7x
topology: tpu7x:2x2x1
jax: 0.10.0
libtpu: 0.0.40
codegen_flags: <defaults>
</compile_context>

<pallas_src>
import jax
import jax.numpy as jnp
from jax import lax
from jax.experimental import pallas as pl
from jax.experimental.pallas import tpu as pltpu

# ---- config (small shapes consistent with the module's __init__) ----
VOCAB = 64            # config.vocab_size / n_token
D_EMBED = 32          # config.d_embed
D_MODEL = 32          # config.d_model (= d_proj)
N_HEAD = 2            # unused in this truncated forward
D_HEAD = 16           # unused in this truncated forward
CUTOFFS = [16, 32]    # config.cutoffs
DIV_VAL = 2           # config.div_val (>1 -> multi-cluster adaptive path)
Q_LEN = 8
BS = 2

CUTOFF_ENDS = [0] + CUTOFFS + [VOCAB]
N_CLUSTERS = len(CUTOFF_ENDS) - 1
EMB_SCALE = D_MODEL ** (-0.5)

LANES = 128
VOCAB_PAD = -(-VOCAB // LANES) * LANES       # vocab padded to one 128-lane segment
TILE_ROWS_CAP = 64                           # packed rows per grid step (vreg bound)


def _pick_p_pack():
    """Tokens packed per output row (lane-dense output, generation-aware)."""
    if D_MODEL >= LANES or LANES % D_MODEL != 0:
        return 1
    p = LANES // D_MODEL                     # 128-lane output: matches v5e MXU width
    try:
        kind = jax.devices()[0].device_kind.lower()
    except Exception:
        kind = ""
    if "v6" in kind or "v7" in kind:         # 256-wide MXU on v6e / v7x -> N = 256
        p *= 2
    return p


def make_params(key):
    """Deterministic init of per-cluster embedding tables + projections (f32)."""
    tables, projs = [], []
    for i in range(N_CLUSTERS):
        l, r = CUTOFF_ENDS[i], CUTOFF_ENDS[i + 1]
        d_emb_i = D_EMBED // (DIV_VAL ** i)
        key, k1, k2 = jax.random.split(key, 3)
        tables.append(0.02 * jax.random.normal(k1, (r - l, d_emb_i), jnp.float32))
        projs.append(0.02 * jax.random.normal(k2, (D_MODEL, d_emb_i), jnp.float32))
    return tables, projs


def prepare_fused_table(tables, projs, p):
    """One-time parameter prep (hoisted out of the forward).

    Returns the block-diagonal bf16 table (p*VOCAB_PAD, p*D_MODEL):
      rows [l:r] of each diagonal block = tables[i] @ projs[i].T * emb_scale,
      padded vocab rows are zero, emb_scale folded in, rounded to bf16 once.
    """
    w = jnp.zeros((VOCAB_PAD, D_MODEL), jnp.float32)
    for i in range(N_CLUSTERS):
        l, r = CUTOFF_ENDS[i], CUTOFF_ENDS[i + 1]
        w = w.at[l:r].set((tables[i] @ projs[i].T) * EMB_SCALE)
    w_block = jnp.kron(jnp.eye(p, dtype=jnp.float32), w)     # (p*V_PAD, p*D_MODEL)
    return w_block.astype(jnp.bfloat16)


def _adaptive_emb_kernel(tok_ref, w_ref, out_ref):
    """Single-matmul adaptive embedding lookup, P tokens packed per output row.

    tok_ref: (tile_rows, P) int32 packed token ids (token t = row*P + slot).
    w_ref:   (P*VOCAB_PAD, P*D_MODEL) bf16 block-diagonal fused table.
    out_ref: (tile_rows, P*D_MODEL) f32 packed embeddings (lane-dense).
    """
    tok = tok_ref[...]                                       # (R, P) int32
    rows, p = tok.shape
    lane = lax.broadcasted_iota(jnp.int32, (rows, VOCAB_PAD), 1)
    parts = []
    for s in range(p):
        # exact 0/1 one-hot for pack slot s, built directly in the MXU dtype
        parts.append((lane == tok[:, s:s + 1]).astype(w_ref.dtype))
    onehot = jnp.concatenate(parts, axis=-1)                 # (R, P*VOCAB_PAD) bf16
    out_ref[...] = jnp.dot(onehot, w_ref[...],
                           preferred_element_type=jnp.float32).astype(out_ref.dtype)


def adaptive_embedding(tok_flat, w_block):
    """AdaptiveEmbedding (div_val > 1 path) for flat int32 tokens -> (n, D_MODEL)."""
    n = tok_flat.shape[0]
    p = w_block.shape[1] // D_MODEL          # pack factor baked into the prepared table

    rows_needed = -(-n // p)                 # ceil(n / tokens-per-row)
    rows_aligned = -(-rows_needed // 8) * 8  # 8-sublane aligned
    tile_rows = min(TILE_ROWS_CAP, rows_aligned)
    # Prefer >=2 grid steps (megacore / v7x 2-TC sharding) whenever there is more
    # than one 8-row group of work.
    if rows_aligned > 8 and rows_aligned // tile_rows < 2:
        tile_rows = max(8, ((rows_aligned // 2) // 8) * 8)
    total_rows = -(-rows_aligned // tile_rows) * tile_rows
    n_pad = total_rows * p

    tok = jnp.pad(tok_flat.astype(jnp.int32), (0, n_pad - n)).reshape(total_rows, p)

    grid = (total_rows // tile_rows,)
    out_packed = pl.pallas_call(
        _adaptive_emb_kernel,
        out_shape=jax.ShapeDtypeStruct((total_rows, p * D_MODEL), jnp.float32),
        grid=grid,
        in_specs=[
            pl.BlockSpec((tile_rows, p), lambda i: (i, 0)),
            # Constant block every step; ideally single-buffered
            # (pipeline_mode=pl.Buffered(1)) — left at the default here since the
            # block-diag table is only ~128-512 KiB in bf16.
            pl.BlockSpec((p * VOCAB_PAD, p * D_MODEL), lambda i: (0, 0)),
        ],
        out_specs=pl.BlockSpec((tile_rows, p * D_MODEL), lambda i: (i, 0)),
        compiler_params=pltpu.CompilerParams(
            dimension_semantics=("parallel",),
            vmem_limit_bytes=32 * 1024 * 1024,
        ),
    )(tok, w_block)

    return out_packed.reshape(n_pad, D_MODEL)[:n]


def transformer_xl_forward(input_ids, w_block):
    # PyTorch: input_ids.transpose(0, 1) -> (q_len, bs); mems = init_mems(bs);
    # word_emb = self.word_emb(input_ids)  (the reference forward body ends here).
    # TODO(synk): init_mems references undefined attrs (n_layer / mem_len / config)
    # in the reference module, so mems are not materialized here.
    inp = input_ids.T                        # (q_len, bs)
    q_len, bs = inp.shape
    flat = inp.reshape(-1)
    emb_flat = adaptive_embedding(flat, w_block)
    return emb_flat.reshape(q_len, bs, D_MODEL)


def _ref_forward(input_ids, tables, projs):
    """Pure-JAX f32 reference of AdaptiveEmbedding (div_val > 1 path)."""
    inp = input_ids.T
    flat = inp.reshape(-1)
    out = jnp.zeros((flat.shape[0], D_MODEL), jnp.float32)
    for i in range(N_CLUSTERS):
        l, r = CUTOFF_ENDS[i], CUTOFF_ENDS[i + 1]
        mask = (flat >= l) & (flat < r)
        idx = jnp.clip(flat - l, 0, r - l - 1)
        emb = tables[i][idx]
        proj = emb @ projs[i].T
        out = out + jnp.where(mask[:, None], proj, 0.0)
    return (out * EMB_SCALE).reshape(inp.shape + (D_MODEL,))


if __name__ == "__main__":
    key = jax.random.PRNGKey(0)
    kp, kt = jax.random.split(key)
    tables, projs = make_params(kp)
    input_ids = jax.random.randint(kt, (BS, Q_LEN), 0, VOCAB, dtype=jnp.int32)

    # One-time parameter preparation (reused across every forward call).
    p_pack = _pick_p_pack()
    w_block = jax.block_until_ready(prepare_fused_table(tables, projs, p_pack))

    fwd = jax.jit(transformer_xl_forward)
    out = jax.block_until_ready(fwd(input_ids, w_block))

    ref = _ref_forward(input_ids, tables, projs)
    assert out.shape == (Q_LEN, BS, D_MODEL)
    # bf16 fused-table rounding (~2^-9 relative) is the only deviation from the
    # f32 reference; values are O(4e-4), so this tolerance has >100x margin.
    assert jnp.allclose(out, ref, atol=1e-4, rtol=1e-2), float(jnp.max(jnp.abs(out - ref)))
    print("KERNEL_OK")
</pallas_src>

<mosaic_0001>
module attributes {stable_mosaic.version = 11 : i64} {
  func.func @_adaptive_emb_kernel(%arg0: i32, %arg1: memref<8x4xi32, #tpu.memory_space<vmem>>, %arg2: memref<512x128xbf16, #tpu.memory_space<vmem>>, %arg3: memref<8x128xf32, #tpu.memory_space<vmem>>) attributes {dimension_semantics = [#tpu.dimension_semantics<parallel>], iteration_bounds = array<i64: 1>, scalar_prefetch = 0 : i64, scratch_operands = 0 : i64, tpu.core_type = #tpu.core_type<tc>, window_params = [{transform_indices = @transform_0, window_bounds = array<i64: 8, 4>}, {pipeline_mode = #tpu.pipeline_mode<synchronous>, transform_indices = @transform_1, window_bounds = array<i64: 512, 128>}, {transform_indices = @transform_2, window_bounds = array<i64: 8, 128>}]} {
    %c0 = arith.constant 0 : index
    %c0_0 = arith.constant 0 : index
    %0 = vector.load %arg1[%c0, %c0_0] : memref<8x4xi32, #tpu.memory_space<vmem>>, vector<8x4xi32>
    %1 = tpu.iota {dimensions = array<i32: 1>} : vector<8x128xi32>
    %2 = vector.extract_strided_slice %0 {offsets = [0, 0], sizes = [8, 1], strides = [1, 1]} : vector<8x4xi32> to vector<8x1xi32>
    %3 = vector.broadcast %2 : vector<8x1xi32> to vector<8x128xi32>
    %4 = arith.cmpi eq, %1, %3 : vector<8x128xi32>
    %5 = arith.extui %4 : vector<8x128xi1> to vector<8x128xi32>
    %6 = arith.sitofp %5 : vector<8x128xi32> to vector<8x128xf32>
    %7 = arith.truncf %6 : vector<8x128xf32> to vector<8x128xbf16>
    %8 = vector.extract_strided_slice %0 {offsets = [0, 1], sizes = [8, 1], strides = [1, 1]} : vector<8x4xi32> to vector<8x1xi32>
    %9 = vector.broadcast %8 : vector<8x1xi32> to vector<8x128xi32>
    %10 = arith.cmpi eq, %1, %9 : vector<8x128xi32>
    %11 = arith.extui %10 : vector<8x128xi1> to vector<8x128xi32>
    %12 = arith.sitofp %11 : vector<8x128xi32> to vector<8x128xf32>
    %13 = arith.truncf %12 : vector<8x128xf32> to vector<8x128xbf16>
    %14 = vector.extract_strided_slice %0 {offsets = [0, 2], sizes = [8, 1], strides = [1, 1]} : vector<8x4xi32> to vector<8x1xi32>
    %15 = vector.broadcast %14 : vector<8x1xi32> to vector<8x128xi32>
    %16 = arith.cmpi eq, %1, %15 : vector<8x128xi32>
    %17 = arith.extui %16 : vector<8x128xi1> to vector<8x128xi32>
    %18 = arith.sitofp %17 : vector<8x128xi32> to vector<8x128xf32>
    %19 = arith.truncf %18 : vector<8x128xf32> to vector<8x128xbf16>
    %20 = vector.extract_strided_slice %0 {offsets = [0, 3], sizes = [8, 1], strides = [1, 1]} : vector<8x4xi32> to vector<8x1xi32>
    %21 = vector.broadcast %20 : vector<8x1xi32> to vector<8x128xi32>
    %22 = arith.cmpi eq, %1, %21 : vector<8x128xi32>
    %23 = arith.extui %22 : vector<8x128xi1> to vector<8x128xi32>
    %24 = arith.sitofp %23 : vector<8x128xi32> to vector<8x128xf32>
    %25 = arith.truncf %24 : vector<8x128xf32> to vector<8x128xbf16>
    %26 = tpu.concatenate %7, %13, %19, %25 in 1 : vector<8x128xbf16>, vector<8x128xbf16>, vector<8x128xbf16>, vector<8x128xbf16> -> vector<8x512xbf16>
    %c0_1 = arith.constant 0 : index
    %c0_2 = arith.constant 0 : index
    %27 = vector.load %arg2[%c0_1, %c0_2] : memref<512x128xbf16, #tpu.memory_space<vmem>>, vector<512x128xbf16>
    %cst = arith.constant dense<0.000000e+00> : vector<8x128xf32>
    %28 = tpu.matmul %26, %27, %cst {dimension_numbers = #tpu.dot_dimension_numbers<[1], [0], [0], [1], [0, 0, 1, 1], [], []>} : vector<8x512xbf16>, vector<512x128xbf16>, vector<8x128xf32> -> vector<8x128xf32>
    %c0_3 = arith.constant 0 : index
    %c0_4 = arith.constant 0 : index
    %29 = vector.load %arg3[%c0_3, %c0_4] : memref<8x128xf32, #tpu.memory_space<vmem>>, vector<8x128xf32>
    tpu.vector_store %arg3[%c0_3, %c0_4], %28 {strides = array<i32>} : memref<8x128xf32, #tpu.memory_space<vmem>>, vector<8x128xf32>,
    return
  }
  func.func @transform_0(%arg0: i32) -> (i32, i32) {
    %c0_i32 = arith.constant 0 : i32
    %c0_i32_0 = arith.constant 0 : i32
    return %arg0, %c0_i32 : i32, i32
  }
  func.func @transform_1(%arg0: i32) -> (i32, i32) {
    %c0_i32 = arith.constant 0 : i32
    %c0_i32_0 = arith.constant 0 : i32
    %c0_i32_1 = arith.constant 0 : i32
    return %c0_i32, %c0_i32_0 : i32, i32
  }
  func.func @transform_2(%arg0: i32) -> (i32, i32) {
    %c0_i32 = arith.constant 0 : i32
    %c0_i32_0 = arith.constant 0 : i32
    return %arg0, %c0_i32 : i32, i32
  }
}

</mosaic_0001>

<llo_original>
// kernel: transformer_xl_forward.1
$region0: #{transformer_xl_forward.1}
  #allocation0 [shape = 'u32[]', space=smem, size = 0x4, offset = 0x4, fixed_abs, tag = 'smem constant byte address 0x4 - core index']
  #allocation1 [shape = 'u32[144,128]{1,0:T(1,128)}', space=vmem, size = 0x12000, scoped, tag = 'internal scratch']
  %s0 = inlined_call_operand.vmem [shape: s32[8,4], index: 0, kind: input, shape index: {}]
  %s1 = inlined_call_operand.hbm [shape: bf16[512,128], index: 1, kind: input, shape index: {}]
  %s2 = inlined_call_operand.vmem [shape: f32[8,128], index: 2, kind: output, shape index: {}]
  %s3 = sld [smem:[#allocation0]]
  $region22: #{transformer_xl_forward.1} parent=0
    _
  %s5 = ssub.s32 1, %s3
  %s6 = scalar_select 0, %s5, %s3
  $region1: #{transformer_xl_forward.1} parent=0
    #allocation2 [shape = 'u8[131072]{0}', space=vmem, size = 0x20000, scoped, tag = 'input window, operand 1, single buffered']
    #allocation3 [shape = 's32[1]{0}', space=sflag, size = 0x4, scoped, tag = 'scoped memory for transformer_xl_forward.1']
    %7 = vsyncpa [#allocation3], 0
    // Predicated region
    $region2: #{transformer_xl_forward.1} parent=1 // pred_check
      _
    $region3: #{transformer_xl_forward.1} parent=1 // pred_check_branch
      %9 = sbr.rel (0) target = $region5
    $region4: #{transformer_xl_forward.1} parent=1 // pred_region
      _
    $region5: #{transformer_xl_forward.1} parent=1 // pred_fallthru
      _
    // Predicated region
    $region6: #{transformer_xl_forward.1} parent=1 // pred_check
      _
    $region7: #{transformer_xl_forward.1} parent=1 // pred_check_branch
      %11 = sbr.rel (0) target = $region9
    $region8: #{transformer_xl_forward.1} parent=1 // pred_region
      %s13 = ssub.s32 4096, 4096
      %14 = vsyncadd [#allocation3], %s13
      %s15 = sshll.u32 [#allocation2], 4
      %s16 = int_to_ptr.vmem [resolvable:$true] %s15
      %21 = dma.hbm_to_vmem [thread:$0]  %s1, 4096, %s16, [#allocation3], 64, 64, 4
    $region9: #{transformer_xl_forward.1} parent=1 // pred_fallthru
      _
    // Predicated region
    $region10: #{transformer_xl_forward.1} parent=1 // pred_check
      _
    $region11: #{transformer_xl_forward.1} parent=1 // pred_check_branch
      %23 = sbr.rel (0) target = $region13
    $region12: #{transformer_xl_forward.1} parent=1 // pred_region
      %24 = dma.done [#allocation3], 4096
    $region13: #{transformer_xl_forward.1} parent=1 // pred_fallthru
      _
    %v26 = vld [vmem:[%s0] sm:$0xff]
    %v27 = vlaneseq
    %v28 = vand.u32 %v27, 127
    %29 = vset.pattern.permute.xlu0 0
    %30 = vperm.xlu0 %29, %v26
    %v31 = vpop.permute.xlu0 %30
    %vm32 = vcmp.eq.s32.totalorder %v28, %v31
    %v33 = vsel %vm32, 1, 0
    %v34 = vcvt.s32.f32 %v33
    %v35 = vpack.c.bf16 %v34, %v34
    %36 = vset.pattern.permute.xlu0 1
    %37 = vperm.xlu0 %36, %v26
    %v38 = vpop.permute.xlu0 %37
    %vm39 = vcmp.eq.s32.totalorder %v28, %v38
    %v40 = vsel %vm39, 1, 0
    %v41 = vcvt.s32.f32 %v40
    %v42 = vpack.c.bf16 %v41, %v41
    %43 = vset.pattern.permute.xlu0 2
    %44 = vperm.xlu0 %43, %v26
    %v45 = vpop.permute.xlu0 %44
    %vm46 = vcmp.eq.s32.totalorder %v28, %v45
    %v47 = vsel %vm46, 1, 0
    %v48 = vcvt.s32.f32 %v47
    %v49 = vpack.c.bf16 %v48, %v48
    %50 = vset.pattern.permute.xlu0 3
    %51 = vperm.xlu0 %50, %v26
    %v52 = vpop.permute.xlu0 %51
    %vm53 = vcmp.eq.s32.totalorder %v28, %v52
    %v54 = vsel %vm53, 1, 0
    %v55 = vcvt.s32.f32 %v54
    %v56 = vpack.c.bf16 %v55, %v55
    %v57 = vld [vmem:[#allocation2] sm:$0xf]
    %v58 = vld [vmem:[#allocation2 + $0x4] sm:$0xf]
    %v59 = vld [vmem:[#allocation2 + $0x8] sm:$0xf]
    %v60 = vld [vmem:[#allocation2 + $0xc] sm:$0xf]
    %v61 = vld [vmem:[#allocation2 + $0x10] sm:$0xf]
    %v62 = vld [vmem:[#allocation2 + $0x14] sm:$0xf]
    %v63 = vld [vmem:[#allocation2 + $0x18] sm:$0xf]
    %v64 = vld [vmem:[#allocation2 + $0x1c] sm:$0xf]
    %v65 = vld [vmem:[#allocation2 + $0x20] sm:$0xf]
    %v66 = vld [vmem:[#allocation2 + $0x24] sm:$0xf]
    %v67 = vld [vmem:[#allocation2 + $0x28] sm:$0xf]
    %v68 = vld [vmem:[#allocation2 + $0x2c] sm:$0xf]
    %v69 = vld [vmem:[#allocation2 + $0x30] sm:$0xf]
    %v70 = vld [vmem:[#allocation2 + $0x34] sm:$0xf]
    %v71 = vld [vmem:[#allocation2 + $0x38] sm:$0xf]
    %v72 = vld [vmem:[#allocation2 + $0x3c] sm:$0xf]
    %v73 = vld [vmem:[#allocation2 + $0x40] sm:$0xf]
    %v74 = vld [vmem:[#allocation2 + $0x44] sm:$0xf]
    %v75 = vld [vmem:[#allocation2 + $0x48] sm:$0xf]
    %v76 = vld [vmem:[#allocation2 + $0x4c] sm:$0xf]
    %v77 = vld [vmem:[#allocation2 + $0x50] sm:$0xf]
    %v78 = vld [vmem:[#allocation2 + $0x54] sm:$0xf]
    %v79 = vld [vmem:[#allocation2 + $0x58] sm:$0xf]
    %v80 = vld [vmem:[#allocation2 + $0x5c] sm:$0xf]
    %v81 = vld [vmem:[#allocation2 + $0x60] sm:$0xf]
    %v82 = vld [vmem:[#allocation2 + $0x64] sm:$0xf]
    %v83 = vld [vmem:[#allocation2 + $0x68] sm:$0xf]
    %v84 = vld [vmem:[#allocation2 + $0x6c] sm:$0xf]
    %v85 = vld [vmem:[#allocation2 + $0x70] sm:$0xf]
    %v86 = vld [vmem:[#allocation2 + $0x74] sm:$0xf]
    %v87 = vld [vmem:[#allocation2 + $0x78] sm:$0xf]
    %v88 = vld [vmem:[#allocation2 + $0x7c] sm:$0xf]
    %v89 = vld [vmem:[#allocation2 + $0x80] sm:$0xf]
    %v90 = vld [vmem:[#allocation2 + $0x84] sm:$0xf]
    %v91 = vld [vmem:[#allocation2 + $0x88] sm:$0xf]
    %v92 = vld [vmem:[#allocation2 + $0x8c] sm:$0xf]
    %v93 = vld [vmem:[#allocation2 + $0x90] sm:$0xf]
    %v94 = vld [vmem:[#allocation2 + $0x94] sm:$0xf]
    %v95 = vld [vmem:[#allocation2 + $0x98] sm:$0xf]
    %v96 = vld [vmem:[#allocation2 + $0x9c] sm:$0xf]
    %v97 = vld [vmem:[#allocation2 + $0xa0] sm:$0xf]
    %v98 = vld [vmem:[#allocation2 + $0xa4] sm:$0xf]
    %v99 = vld [vmem:[#allocation2 + $0xa8] sm:$0xf]
    %v100 = vld [vmem:[#allocation2 + $0xac] sm:$0xf]
    %v101 = vld [vmem:[#allocation2 + $0xb0] sm:$0xf]
    %v102 = vld [vmem:[#allocation2 + $0xb4] sm:$0xf]
    %v103 = vld [vmem:[#allocation2 + $0xb8] sm:$0xf]
    %v104 = vld [vmem:[#allocation2 + $0xbc] sm:$0xf]
    %v105 = vld [vmem:[#allocation2 + $0xc0] sm:$0xf]
    %v106 = vld [vmem:[#allocation2 + $0xc4] sm:$0xf]
    %v107 = vld [vmem:[#allocation2 + $0xc8] sm:$0xf]
    %v108 = vld [vmem:[#allocation2 + $0xcc] sm:$0xf]
    %v109 = vld [vmem:[#allocation2 + $0xd0] sm:$0xf]
    %v110 = vld [vmem:[#allocation2 + $0xd4] sm:$0xf]
    %v111 = vld [vmem:[#allocation2 + $0xd8] sm:$0xf]
    %v112 = vld [vmem:[#allocation2 + $0xdc] sm:$0xf]
    %v113 = vld [vmem:[#allocation2 + $0xe0] sm:$0xf]
    %v114 = vld [vmem:[#allocation2 + $0xe4] sm:$0xf]
    %v115 = vld [vmem:[#allocation2 + $0xe8] sm:$0xf]
    %v116 = vld [vmem:[#allocation2 + $0xec] sm:$0xf]
    %v117 = vld [vmem:[#allocation2 + $0xf0] sm:$0xf]
    %v118 = vld [vmem:[#allocation2 + $0xf4] sm:$0xf]
    %v119 = vld [vmem:[#allocation2 + $0xf8] sm:$0xf]
    %v120 = vld [vmem:[#allocation2 + $0xfc] sm:$0xf]
    %v185 = vunpack.c.l.b16 %v57
    %v186 = vunpack.c.l.b16 %v58
    %v187 = vunpack.c.l.b16 %v59
    %v188 = vunpack.c.l.b16 %v60
    %v189 = vunpack.c.l.b16 %v61
    %v190 = vunpack.c.l.b16 %v62
    %v191 = vunpack.c.l.b16 %v63
    %v192 = vunpack.c.l.b16 %v64
    %v193 = vunpack.c.l.b16 %v65
    %v194 = vunpack.c.l.b16 %v66
    %v195 = vunpack.c.l.b16 %v67
    %v196 = vunpack.c.l.b16 %v68
    %v197 = vunpack.c.l.b16 %v69
    %v198 = vunpack.c.l.b16 %v70
    %v199 = vunpack.c.l.b16 %v71
    %v200 = vunpack.c.l.b16 %v72
    %v201 = vunpack.c.l.b16 %v73
    %v202 = vunpack.c.l.b16 %v74
    %v203 = vunpack.c.l.b16 %v75
    %v204 = vunpack.c.l.b16 %v76
    %v205 = vunpack.c.l.b16 %v77
    %v206 = vunpack.c.l.b16 %v78
    %v207 = vunpack.c.l.b16 %v79
    %v208 = vunpack.c.l.b16 %v80
    %v209 = vunpack.c.l.b16 %v81
    %v210 = vunpack.c.l.b16 %v82
    %v211 = vunpack.c.l.b16 %v83
    %v212 = vunpack.c.l.b16 %v84
    %v213 = vunpack.c.l.b16 %v85
    %v214 = vunpack.c.l.b16 %v86
    %v215 = vunpack.c.l.b16 %v87
    %v216 = vunpack.c.l.b16 %v88
    %v217 = vunpack.c.l.b16 %v89
    %v218 = vunpack.c.l.b16 %v90
    %v219 = vunpack.c.l.b16 %v91
    %v220 = vunpack.c.l.b16 %v92
    %v221 = vunpack.c.l.b16 %v93
    %v222 = vunpack.c.l.b16 %v94
    %v223 = vunpack.c.l.b16 %v95
    %v224 = vunpack.c.l.b16 %v96
    %v225 = vunpack.c.l.b16 %v97
    %v226 = vunpack.c.l.b16 %v98
    %v227 = vunpack.c.l.b16 %v99
    %v228 = vunpack.c.l.b16 %v100
    %v229 = vunpack.c.l.b16 %v101
    %v230 = vunpack.c.l.b16 %v102
    %v231 = vunpack.c.l.b16 %v103
    %v232 = vunpack.c.l.b16 %v104
    %v233 = vunpack.c.l.b16 %v105
    %v234 = vunpack.c.l.b16 %v106
    %v235 = vunpack.c.l.b16 %v107
    %v236 = vunpack.c.l.b16 %v108
    %v237 = vunpack.c.l.b16 %v109
    %v238 = vunpack.c.l.b16 %v110
    %v239 = vunpack.c.l.b16 %v111
    %v240 = vunpack.c.l.b16 %v112
    %v241 = vunpack.c.l.b16 %v113
    %v242 = vunpack.c.l.b16 %v114
    %v243 = vunpack.c.l.b16 %v115
    %v244 = vunpack.c.l.b16 %v116
    %v245 = vunpack.c.l.b16 %v117
    %v246 = vunpack.c.l.b16 %v118
    %v247 = vunpack.c.l.b16 %v119
    %v248 = vunpack.c.l.b16 %v120
    %v249 = vpack.c.b16 %v186, %v185
    %v250 = vpack.c.b16 %v188, %v187
    %v251 = vpack.c.b16 %v190, %v189
    %v252 = vpack.c.b16 %v192, %v191
    %v253 = vpack.c.b16 %v194, %v193
    %v254 = vpack.c.b16 %v196, %v195
    %v255 = vpack.c.b16 %v198, %v197
    %v256 = vpack.c.b16 %v200, %v199
    %v257 = vpack.c.b16 %v202, %v201
    %v258 = vpack.c.b16 %v204, %v203
    %v259 = vpack.c.b16 %v206, %v205
    %v260 = vpack.c.b16 %v208, %v207
    %v261 = vpack.c.b16 %v210, %v209
    %v262 = vpack.c.b16 %v212, %v211
    %v263 = vpack.c.b16 %v214, %v213
    %v264 = vpack.c.b16 %v216, %v215
    %v265 = vpack.c.b16 %v218, %v217
    %v266 = vpack.c.b16 %v220, %v219
    %v267 = vpack.c.b16 %v222, %v221
    %v268 = vpack.c.b16 %v224, %v223
    %v269 = vpack.c.b16 %v226, %v225
    %v270 = vpack.c.b16 %v228, %v227
    %v271 = vpack.c.b16 %v230, %v229
    %v272 = vpack.c.b16 %v232, %v231
    %v273 = vpack.c.b16 %v234, %v233
    %v274 = vpack.c.b16 %v236, %v235
    %v275 = vpack.c.b16 %v238, %v237
    %v276 = vpack.c.b16 %v240, %v239
    %v277 = vpack.c.b16 %v242, %v241
    %v278 = vpack.c.b16 %v244, %v243
    %v279 = vpack.c.b16 %v246, %v245
    %v280 = vpack.c.b16 %v248, %v247
    %313 = vmatprep.subr.bf16.mxu0 0
    %314 = vmatpush1.bf16.msra.mxu0 %v249
    %315 = vmatprep.subr.bf16.mxu0 0
    %316 = vmatpush1.bf16.msra.mxu0 %v250
    %317 = vmatprep.subr.bf16.mxu0 0
    %318 = vmatpush1.bf16.msra.mxu0 %v251
    %319 = vmatprep.subr.bf16.mxu0 0
    %320 = vmatpush1.bf16.msra.mxu0 %v252
    %321 = vmatprep.subr.bf16.mxu0 0
    %322 = vmatpush1.bf16.msra.mxu0 %v253
    %323 = vmatprep.subr.bf16.mxu0 0
    %324 = vmatpush1.bf16.msra.mxu0 %v254
    %325 = vmatprep.subr.bf16.mxu0 0
    %326 = vmatpush1.bf16.msra.mxu0 %v255
    %327 = vmatprep.subr.bf16.mxu0 0
    %328 = vmatpush1.bf16.msra.mxu0 %v256
    %329 = vmatprep.subr.bf16.mxu0 0
    %330 = vmatpush1.bf16.msra.mxu0 %v257
    %331 = vmatprep.subr.bf16.mxu0 0
    %332 = vmatpush1.bf16.msra.mxu0 %v258
    %333 = vmatprep.subr.bf16.mxu0 0
    %334 = vmatpush1.bf16.msra.mxu0 %v259
    %335 = vmatprep.subr.bf16.mxu0 0
    %336 = vmatpush1.bf16.msra.mxu0 %v260
    %337 = vmatprep.subr.bf16.mxu0 0
    %338 = vmatpush1.bf16.msra.mxu0 %v261
    %339 = vmatprep.subr.bf16.mxu0 0
    %340 = vmatpush1.bf16.msra.mxu0 %v262
    %341 = vmatprep.subr.bf16.mxu0 0
    %342 = vmatpush1.bf16.msra.mxu0 %v263
    %343 = vmatprep.subr.bf16.mxu0 0
    %344 = vmatpush1.bf16.msra.mxu0 %v264
    %345 = vmatprep.mubr.bf16.mxu0 %v42
    %346 = vmatmul.mubr.bf16.gmra.mrb[0].mxu0 %v35
    %v347 = vpop.f32.mrb[0].mxu0
    %v348 = vadd.f32 0.0, %v347
    %v349 = vpop.f32.mrb[0].mxu0
    %v350 = vpop.f32.mrb[0].mxu0
    %v351 = vpop.f32.mrb[0].mxu0
    %352 = vdwg.mxu0
    %353 = vmatprep.subr.bf16.mxu0 0
    %354 = vmatpush1.bf16.msra.mxu0 %v265
    %355 = vmatprep.subr.bf16.mxu0 0
    %356 = vmatpush1.bf16.msra.mxu0 %v266
    %357 = vmatprep.subr.bf16.mxu0 0
    %358 = vmatpush1.bf16.msra.mxu0 %v267
    %359 = vmatprep.subr.bf16.mxu0 0
    %360 = vmatpush1.bf16.msra.mxu0 %v268
    %361 = vmatprep.subr.bf16.mxu0 0
    %362 = vmatpush1.bf16.msra.mxu0 %v269
    %363 = vmatprep.subr.bf16.mxu0 0
    %364 = vmatpush1.bf16.msra.mxu0 %v270
    %365 = vmatprep.subr.bf16.mxu0 0
    %366 = vmatpush1.bf16.msra.mxu0 %v271
    %367 = vmatprep.subr.bf16.mxu0 0
    %368 = vmatpush1.bf16.msra.mxu0 %v272
    %369 = vmatprep.subr.bf16.mxu0 0
    %370 = vmatpush1.bf16.msra.mxu0 %v273
    %371 = vmatprep.subr.bf16.mxu0 0
    %372 = vmatpush1.bf16.msra.mxu0 %v274
    %373 = vmatprep.subr.bf16.mxu0 0
    %374 = vmatpush1.bf16.msra.mxu0 %v275
    %375 = vmatprep.subr.bf16.mxu0 0
    %376 = vmatpush1.bf16.msra.mxu0 %v276
    %377 = vmatprep.subr.bf16.mxu0 0
    %378 = vmatpush1.bf16.msra.mxu0 %v277
    %379 = vmatprep.subr.bf16.mxu0 0
    %380 = vmatpush1.bf16.msra.mxu0 %v278
    %381 = vmatprep.subr.bf16.mxu0 0
    %382 = vmatpush1.bf16.msra.mxu0 %v279
    %383 = vmatprep.subr.bf16.mxu0 0
    %384 = vmatpush1.bf16.msra.mxu0 %v280
    %385 = vmatprep.mubr.bf16.mxu0 %v56
    %386 = vmatmul.mubr.bf16.gmra.mrb[0].mxu0 %v49
    %v387 = vpop.f32.mrb[0].mxu0
    %v388 = vadd.f32 %v348, %v387
    %v389 = vpop.f32.mrb[0].mxu0
    %v390 = vpop.f32.mrb[0].mxu0
    %v391 = vpop.f32.mrb[0].mxu0
    %392 = vdwg.mxu0
    %393 = vst [vmem:[%s2] sm:$0xff] %v388
    // Predicated region
    $region14: #{transformer_xl_forward.1} parent=1 // pred_check
      _
    $region15: #{transformer_xl_forward.1} parent=1 // pred_check_branch
      %395 = sbr.rel (0) target = $region17
    $region16: #{transformer_xl_forward.1} parent=1 // pred_region
      _
    $region17: #{transformer_xl_forward.1} parent=1 // pred_fallthru
      _
    // Predicated region
    $region18: #{transformer_xl_forward.1} parent=1 // pred_check
      _
    $region19: #{transformer_xl_forward.1} parent=1 // pred_check_branch
      %397 = sbr.rel (0) target = $region21
    $region20: #{transformer_xl_forward.1} parent=1 // pred_region
      _
    $region21: #{transformer_xl_forward.1} parent=1 // pred_fallthru
      _
    %398 = vsyncpa [#allocation3], 1

</llo_original>
